<compile_context>
chip_gen: v5e
topology: v5e:2x2
jax: 0.10.0
libtpu: 0.0.40
codegen_flags: <defaults>
</compile_context>

<pallas_src>
import jax
import jax.numpy as jnp
from jax.experimental import pallas as pl
from jax.experimental.pallas import tpu as pltpu


INPUT_SIZE = 3
HIDDEN_SIZE = 16            # module hidden_size; internal width = 2*hidden_size
OUTPUT_SIZE = 1
H2 = HIDDEN_SIZE * 2        # 32
LANES = 128                 # lane-dense padding for every feature axis
KIN = 8                     # augmented/padded input width: [x(3), 1, 0-pad]
BIAS_COL = INPUT_SIZE       # constant-1 column in the augmented x
CONST_LANE = H2             # constant-1 lane carried through the activations
NEG_SLOPE = 0.01


def _leaky_relu(x):
    return jnp.where(x > 0, x, NEG_SLOPE * x)


def _knn_rollout_kernel(x_ref, h0_ref, w1_ref, wsr_ref, w2_ref, wf_ref,
                        y_ref, h_ref, h_carry):
    t = pl.program_id(0)

    @pl.when(t == 0)
    def _():
        h_carry[...] = h0_ref[...]

    x = x_ref[0]                                  # (B, KIN) this timestep
    h_prev = h_carry[...]                         # (B, LANES); rows >=H2 of W_sr are 0

    # Layer 1: x@W_ih + (b_ih + b_sr) via constant-1 column + h_prev@W_sr.
    # Lane CONST_LANE of the result is exactly 1 (seeds the bias lane),
    # lanes > H2 stay exactly 0.
    pre1 = (jnp.dot(x, w1_ref[...], preferred_element_type=jnp.float32)
            + jnp.dot(h_prev, wsr_ref[...], preferred_element_type=jnp.float32))
    h1 = _leaky_relu(pre1)

    # Single hidden Linear (num_layers-1 == 1); b_h1 folded via the constant lane,
    # which W2 also carries forward for the output head's bias.
    h2 = _leaky_relu(jnp.dot(h1, w2_ref[...], preferred_element_type=jnp.float32))

    h_carry[...] = h2                             # recurrent carry stays in VMEM
    h_ref[0] = h2                                 # bit-exact hidden, lane-dense store
    # Output head: y lands in lane 0, b_out folded via the constant lane.
    y_ref[0] = jnp.dot(h2, wf_ref[...], preferred_element_type=jnp.float32)


def prepare_kernel_params(params):
    """One-time fusion/padding of weights into lane-dense kernel operands."""
    f32 = jnp.float32

    # w1: rows 0:3 = W_ih, row BIAS_COL = b_ih + b_sr (+ seed of constant lane).
    w1 = jnp.zeros((KIN, LANES), f32)
    w1 = w1.at[:INPUT_SIZE, :H2].set(params["w_ih"].astype(f32))
    w1 = w1.at[BIAS_COL, :H2].set((params["b_ih"] + params["b_sr"]).reshape(-1).astype(f32))
    w1 = w1.at[BIAS_COL, CONST_LANE].set(1.0)

    # W_sr padded; rows/cols >= H2 are zero so padding and the constant lane never leak.
    wsr = jnp.zeros((LANES, LANES), f32).at[:H2, :H2].set(params["w_sr"].astype(f32))

    # w2: rows 0:32 = W_h1, row CONST_LANE = [b_h1 | 1 at CONST_LANE | 0...].
    w2 = jnp.zeros((LANES, LANES), f32).at[:H2, :H2].set(params["w_h1"].astype(f32))
    w2 = w2.at[CONST_LANE, :H2].set(params["b_h1"].reshape(-1).astype(f32))
    w2 = w2.at[CONST_LANE, CONST_LANE].set(1.0)

    # wf: column 0 = [W_out ; b_out ; 0...]; all other lanes zero.
    wf = jnp.zeros((LANES, LANES), f32)
    wf = wf.at[:H2, :OUTPUT_SIZE].set(params["w_out"].astype(f32))
    wf = wf.at[CONST_LANE, :OUTPUT_SIZE].set(params["b_out"].reshape(-1).astype(f32))

    return {"w1": w1, "wsr": wsr, "w2": w2, "wf": wf}


@jax.jit
def knn_rollout(xs, prev_hidden, kparams):
    """xs: (T, B, input_size), prev_hidden: (1|B, 2H).
    Returns (ys (T, B, 1), hiddens (T, B, 2H)); hiddens[t] is the state after step t."""
    T, B, _ = xs.shape
    xs = xs.astype(jnp.float32)

    x_aug = jnp.zeros((T, B, KIN), jnp.float32)
    x_aug = x_aug.at[:, :, :INPUT_SIZE].set(xs)
    x_aug = x_aug.at[:, :, BIAS_COL].set(1.0)

    h0 = jnp.zeros((B, LANES), jnp.float32)
    h0 = h0.at[:, :H2].set(jnp.broadcast_to(prev_hidden.astype(jnp.float32), (B, H2)))

    resident = lambda shape: pl.BlockSpec(shape, lambda t: (0, 0))

    y_pad, h_pad = pl.pallas_call(
        _knn_rollout_kernel,
        grid=(T,),
        in_specs=[
            pl.BlockSpec((1, B, KIN), lambda t: (t, 0, 0)),   # per-step x stream
            resident((B, LANES)),                             # initial hidden
            resident((KIN, LANES)),                           # fused layer-1 weight
            resident((LANES, LANES)),                         # W_sr
            resident((LANES, LANES)),                         # fused hidden-layer weight
            resident((LANES, LANES)),                         # fused output head
        ],
        out_specs=[
            pl.BlockSpec((1, B, LANES), lambda t: (t, 0, 0)),  # y slab per step
            pl.BlockSpec((1, B, LANES), lambda t: (t, 0, 0)),  # hidden slab per step
        ],
        out_shape=[
            jax.ShapeDtypeStruct((T, B, LANES), jnp.float32),
            jax.ShapeDtypeStruct((T, B, LANES), jnp.float32),
        ],
        scratch_shapes=[pltpu.VMEM((B, LANES), jnp.float32)],  # carried hidden state
        compiler_params=pltpu.CompilerParams(dimension_semantics=("arbitrary",)),
    )(x_aug, h0, kparams["w1"], kparams["wsr"], kparams["w2"], kparams["wf"])

    ys = y_pad[:, :, :OUTPUT_SIZE]
    hiddens = h_pad[:, :, :H2]
    return ys, hiddens


def knn_forward(x, prev_hidden, params=None, kparams=None):
    """Single-step API matching the module's forward(x, prev_hidden) -> (y, hidden)."""
    if kparams is None:
        kparams = prepare_kernel_params(params)
    ys, hiddens = knn_rollout(x[None], prev_hidden, kparams)
    return ys[0], hiddens[0]


def xavier_uniform(key, fan_in, fan_out):
    limit = jnp.sqrt(6.0 / (fan_in + fan_out))
    # stored as (in, out) so the forward computes x @ W directly
    return jax.random.uniform(key, (fan_in, fan_out), jnp.float32, -limit, limit)


def init_params(key):
    k_ih, k_sr, k_h1, k_out = jax.random.split(key, 4)
    return {
        "w_ih": xavier_uniform(k_ih, INPUT_SIZE, H2),
        "b_ih": jnp.zeros((1, H2), jnp.float32),
        "w_sr": xavier_uniform(k_sr, H2, H2),
        "b_sr": jnp.zeros((1, H2), jnp.float32),
        "w_h1": xavier_uniform(k_h1, H2, H2),
        "b_h1": jnp.zeros((1, H2), jnp.float32),
        "w_out": xavier_uniform(k_out, H2, OUTPUT_SIZE),
        "b_out": jnp.zeros((1, OUTPUT_SIZE), jnp.float32),
    }


def knn_reference(x, prev_hidden, params):
    """Pure-JAX single-step reference."""
    B = x.shape[0]
    ph = jnp.broadcast_to(prev_hidden, (B, H2))
    h = _leaky_relu(x @ params["w_ih"] + params["b_ih"]
                    + ph @ params["w_sr"] + params["b_sr"])
    h = _leaky_relu(h @ params["w_h1"] + params["b_h1"])
    y = h @ params["w_out"] + params["b_out"]
    return y, h


def knn_reference_rollout(xs, prev_hidden, params):
    B = xs.shape[1]
    h = jnp.broadcast_to(prev_hidden, (B, H2))
    ys, hs = [], []
    for t in range(xs.shape[0]):
        y, h = knn_reference(xs[t], h, params)
        ys.append(y)
        hs.append(h)
    return jnp.stack(ys), jnp.stack(hs)


# TODO(synk): the module's backward_pass references an undefined `hidden_to_hidden`
# layer in the original source; only the forward recurrence is implemented here.

if __name__ == "__main__":
    key = jax.random.PRNGKey(0)
    k_params, k_x = jax.random.split(key)

    params = init_params(k_params)
    kparams = prepare_kernel_params(params)   # one-time padding/fusion

    T, B = 8, 8
    xs = jax.random.normal(k_x, (T, B, INPUT_SIZE), jnp.float32)
    xs = (xs - xs.mean()) / xs.std()          # mimic the script's normalization

    prev_hidden = jnp.zeros((1, H2), jnp.float32)   # model.initial_hidden

    ys, hiddens = knn_rollout(xs, prev_hidden, kparams)
    ys = jax.block_until_ready(ys)
    hiddens = jax.block_until_ready(hiddens)

    ref_ys, ref_hs = knn_reference_rollout(xs, prev_hidden, params)
    assert ys.shape == (T, B, OUTPUT_SIZE) and hiddens.shape == (T, B, H2)
    assert jnp.allclose(ys, ref_ys, atol=1e-4, rtol=1e-4)
    assert jnp.allclose(hiddens, ref_hs, atol=1e-4, rtol=1e-4)

    # Single-step API (the module's forward contract) sanity check.
    y1, h1 = knn_forward(xs[0], prev_hidden, kparams=kparams)
    y1 = jax.block_until_ready(y1)
    assert jnp.allclose(y1, ref_ys[0], atol=1e-4, rtol=1e-4)
    assert jnp.allclose(h1, ref_hs[0], atol=1e-4, rtol=1e-4)

    print("KERNEL_OK")
</pallas_src>

<mosaic_0001>
module attributes {stable_mosaic.version = 11 : i64} {
  func.func @_knn_rollout_kernel(%arg0: i32, %arg1: memref<1x8x8xf32, #tpu.memory_space<vmem>>, %arg2: memref<8x128xf32, #tpu.memory_space<vmem>>, %arg3: memref<8x128xf32, #tpu.memory_space<vmem>>, %arg4: memref<128x128xf32, #tpu.memory_space<vmem>>, %arg5: memref<128x128xf32, #tpu.memory_space<vmem>>, %arg6: memref<128x128xf32, #tpu.memory_space<vmem>>, %arg7: memref<1x8x128xf32, #tpu.memory_space<vmem>>, %arg8: memref<1x8x128xf32, #tpu.memory_space<vmem>>, %arg9: memref<8x128xf32, #tpu.memory_space<vmem>>) attributes {dimension_semantics = [#tpu.dimension_semantics<arbitrary>], iteration_bounds = array<i64: 8>, scalar_prefetch = 0 : i64, scratch_operands = 1 : i64, tpu.core_type = #tpu.core_type<tc>, window_params = [{transform_indices = @transform_0, window_bounds = array<i64: 1, 8, 8>}, {pipeline_mode = #tpu.pipeline_mode<synchronous>, transform_indices = @transform_1, window_bounds = array<i64: 8, 128>}, {pipeline_mode = #tpu.pipeline_mode<synchronous>, transform_indices = @transform_2, window_bounds = array<i64: 8, 128>}, {pipeline_mode = #tpu.pipeline_mode<synchronous>, transform_indices = @transform_3, window_bounds = array<i64: 128, 128>}, {pipeline_mode = #tpu.pipeline_mode<synchronous>, transform_indices = @transform_4, window_bounds = array<i64: 128, 128>}, {pipeline_mode = #tpu.pipeline_mode<synchronous>, transform_indices = @transform_5, window_bounds = array<i64: 128, 128>}, {transform_indices = @transform_6, window_bounds = array<i64: 1, 8, 128>}, {transform_indices = @transform_7, window_bounds = array<i64: 1, 8, 128>}]} {
    %c0_i32 = arith.constant 0 : i32
    %0 = arith.cmpi eq, %arg0, %c0_i32 : i32
    %1 = arith.extui %0 : i1 to i32
    %c0_i32_0 = arith.constant 0 : i32
    %2 = arith.cmpi ne, %1, %c0_i32_0 : i32
    scf.if %2 {
      %c0_28 = arith.constant 0 : index
      %c0_29 = arith.constant 0 : index
      %32 = vector.load %arg2[%c0_28, %c0_29] : memref<8x128xf32, #tpu.memory_space<vmem>>, vector<8x128xf32>
      %c0_30 = arith.constant 0 : index
      %c0_31 = arith.constant 0 : index
      %33 = vector.load %arg9[%c0_30, %c0_31] : memref<8x128xf32, #tpu.memory_space<vmem>>, vector<8x128xf32>
      tpu.vector_store %arg9[%c0_30, %c0_31], %32 {strides = array<i32>} : memref<8x128xf32, #tpu.memory_space<vmem>>, vector<8x128xf32>,
    } else {
    }
    %c0 = arith.constant 0 : index
    %c0_1 = arith.constant 0 : index
    %c0_2 = arith.constant 0 : index
    %3 = vector.load %arg1[%c0, %c0_1, %c0_2] : memref<1x8x8xf32, #tpu.memory_space<vmem>>, vector<1x8x8xf32>
    %4 = vector.shape_cast %3 : vector<1x8x8xf32> to vector<8x8xf32>
    %c0_3 = arith.constant 0 : index
    %c0_4 = arith.constant 0 : index
    %5 = vector.load %arg9[%c0_3, %c0_4] : memref<8x128xf32, #tpu.memory_space<vmem>>, vector<8x128xf32>
    %c0_5 = arith.constant 0 : index
    %c0_6 = arith.constant 0 : index
    %6 = vector.load %arg3[%c0_5, %c0_6] : memref<8x128xf32, #tpu.memory_space<vmem>>, vector<8x128xf32>
    %cst = arith.constant dense<0.000000e+00> : vector<8x128xf32>
    %7 = tpu.matmul %4, %6, %cst {dimension_numbers = #tpu.dot_dimension_numbers<[1], [0], [0], [1], [0, 0, 1, 1], [], []>} : vector<8x8xf32>, vector<8x128xf32>, vector<8x128xf32> -> vector<8x128xf32>
    %c0_7 = arith.constant 0 : index
    %c0_8 = arith.constant 0 : index
    %8 = vector.load %arg4[%c0_7, %c0_8] : memref<128x128xf32, #tpu.memory_space<vmem>>, vector<128x128xf32>
    %cst_9 = arith.constant dense<0.000000e+00> : vector<8x128xf32>
    %9 = tpu.matmul %5, %8, %cst_9 {dimension_numbers = #tpu.dot_dimension_numbers<[1], [0], [0], [1], [0, 0, 1, 1], [], []>} : vector<8x128xf32>, vector<128x128xf32>, vector<8x128xf32> -> vector<8x128xf32>
    %10 = arith.addf %7, %9 : vector<8x128xf32>
    %cst_10 = arith.constant 0.000000e+00 : f32
    %11 = vector.broadcast %cst_10 : f32 to vector<8x128xf32>
    %12 = arith.cmpf ogt, %10, %11 : vector<8x128xf32>
    %cst_11 = arith.constant 0.00999999977 : f32
    %13 = vector.broadcast %cst_11 : f32 to vector<8x128xf32>
    %14 = arith.mulf %13, %10 : vector<8x128xf32>
    %15 = arith.select %12, %10, %14 : vector<8x128xi1>, vector<8x128xf32>
    %c0_12 = arith.constant 0 : index
    %c0_13 = arith.constant 0 : index
    %16 = vector.load %arg5[%c0_12, %c0_13] : memref<128x128xf32, #tpu.memory_space<vmem>>, vector<128x128xf32>
    %cst_14 = arith.constant dense<0.000000e+00> : vector<8x128xf32>
    %17 = tpu.matmul %15, %16, %cst_14 {dimension_numbers = #tpu.dot_dimension_numbers<[1], [0], [0], [1], [0, 0, 1, 1], [], []>} : vector<8x128xf32>, vector<128x128xf32>, vector<8x128xf32> -> vector<8x128xf32>
    %cst_15 = arith.constant 0.000000e+00 : f32
    %18 = vector.broadcast %cst_15 : f32 to vector<8x128xf32>
    %19 = arith.cmpf ogt, %17, %18 : vector<8x128xf32>
    %cst_16 = arith.constant 0.00999999977 : f32
    %20 = vector.broadcast %cst_16 : f32 to vector<8x128xf32>
    %21 = arith.mulf %20, %17 : vector<8x128xf32>
    %22 = arith.select %19, %17, %21 : vector<8x128xi1>, vector<8x128xf32>
    %c0_17 = arith.constant 0 : index
    %c0_18 = arith.constant 0 : index
    %23 = vector.load %arg9[%c0_17, %c0_18] : memref<8x128xf32, #tpu.memory_space<vmem>>, vector<8x128xf32>
    tpu.vector_store %arg9[%c0_17, %c0_18], %22 {strides = array<i32>} : memref<8x128xf32, #tpu.memory_space<vmem>>, vector<8x128xf32>,
    %c0_19 = arith.constant 0 : index
    %c0_20 = arith.constant 0 : index
    %c0_21 = arith.constant 0 : index
    %24 = vector.load %arg8[%c0_19, %c0_20, %c0_21] : memref<1x8x128xf32, #tpu.memory_space<vmem>>, vector<1x8x128xf32>
    %25 = vector.shape_cast %24 : vector<1x8x128xf32> to vector<8x128xf32>
    %26 = vector.shape_cast %22 : vector<8x128xf32> to vector<1x8x128xf32>
    tpu.vector_store %arg8[%c0_19, %c0_20, %c0_21], %26 {strides = array<i32>} : memref<1x8x128xf32, #tpu.memory_space<vmem>>, vector<1x8x128xf32>,
    %c0_22 = arith.constant 0 : index
    %c0_23 = arith.constant 0 : index
    %27 = vector.load %arg6[%c0_22, %c0_23] : memref<128x128xf32, #tpu.memory_space<vmem>>, vector<128x128xf32>
    %cst_24 = arith.constant dense<0.000000e+00> : vector<8x128xf32>
    %28 = tpu.matmul %22, %27, %cst_24 {dimension_numbers = #tpu.dot_dimension_numbers<[1], [0], [0], [1], [0, 0, 1, 1], [], []>} : vector<8x128xf32>, vector<128x128xf32>, vector<8x128xf32> -> vector<8x128xf32>
    %c0_25 = arith.constant 0 : index
    %c0_26 = arith.constant 0 : index
    %c0_27 = arith.constant 0 : index
    %29 = vector.load %arg7[%c0_25, %c0_26, %c0_27] : memref<1x8x128xf32, #tpu.memory_space<vmem>>, vector<1x8x128xf32>
    %30 = vector.shape_cast %29 : vector<1x8x128xf32> to vector<8x128xf32>
    %31 = vector.shape_cast %28 : vector<8x128xf32> to vector<1x8x128xf32>
    tpu.vector_store %arg7[%c0_25, %c0_26, %c0_27], %31 {strides = array<i32>} : memref<1x8x128xf32, #tpu.memory_space<vmem>>, vector<1x8x128xf32>,
    return
  }
  func.func @transform_0(%arg0: i32) -> (i32, i32, i32) {
    %c0_i32 = arith.constant 0 : i32
    %c0_i32_0 = arith.constant 0 : i32
    %c0_i32_1 = arith.constant 0 : i32
    return %arg0, %c0_i32, %c0_i32_0 : i32, i32, i32
  }
  func.func @transform_1(%arg0: i32) -> (i32, i32) {
    %c0_i32 = arith.constant 0 : i32
    %c0_i32_0 = arith.constant 0 : i32
    %c0_i32_1 = arith.constant 0 : i32
    return %c0_i32, %c0_i32_0 : i32, i32
  }
  func.func @transform_2(%arg0: i32) -> (i32, i32) {
    %c0_i32 = arith.constant 0 : i32
    %c0_i32_0 = arith.constant 0 : i32
    %c0_i32_1 = arith.constant 0 : i32
    return %c0_i32, %c0_i32_0 : i32, i32
  }
  func.func @transform_3(%arg0: i32) -> (i32, i32) {
    %c0_i32 = arith.constant 0 : i32
    %c0_i32_0 = arith.constant 0 : i32
    %c0_i32_1 = arith.constant 0 : i32
    return %c0_i32, %c0_i32_0 : i32, i32
  }
  func.func @transform_4(%arg0: i32) -> (i32, i32) {
    %c0_i32 = arith.constant 0 : i32
    %c0_i32_0 = arith.constant 0 : i32
    %c0_i32_1 = arith.constant 0 : i32
    return %c0_i32, %c0_i32_0 : i32, i32
  }
  func.func @transform_5(%arg0: i32) -> (i32, i32) {
    %c0_i32 = arith.constant 0 : i32
    %c0_i32_0 = arith.constant 0 : i32
    %c0_i32_1 = arith.constant 0 : i32
    return %c0_i32, %c0_i32_0 : i32, i32
  }
  func.func @transform_6(%arg0: i32) -> (i32, i32, i32) {
    %c0_i32 = arith.constant 0 : i32
    %c0_i32_0 = arith.constant 0 : i32
    %c0_i32_1 = arith.constant 0 : i32
    return %arg0, %c0_i32, %c0_i32_0 : i32, i32, i32
  }
  func.func @transform_7(%arg0: i32) -> (i32, i32, i32) {
    %c0_i32 = arith.constant 0 : i32
    %c0_i32_0 = arith.constant 0 : i32
    %c0_i32_1 = arith.constant 0 : i32
    return %arg0, %c0_i32, %c0_i32_0 : i32, i32, i32
  }
}

</mosaic_0001>

<llo_original>
// kernel: knn_rollout.1
$region0: #{knn_rollout.1}
  #allocation0 [shape = 'u32[]', space=smem, size = 0x4, offset = 0x4, fixed_abs, tag = 'smem constant byte address 0x4 - core index']
  #allocation1 [shape = 'u32[72,128]{1,0:T(1,128)}', space=vmem, size = 0x9000, scoped, tag = 'internal scratch']
  #allocation2 [shape = 'f32[8,128]{1,0:T(8,128)}', space=vmem, size = 0x1000, scoped, tag = 'scratch operand']
  %s0 = inlined_call_operand.vmem [shape: f32[8,8,8], index: 0, kind: input, shape index: {}]
  %s1 = inlined_call_operand.vmem [shape: f32[8,128], index: 1, kind: input, shape index: {}]
  %s2 = inlined_call_operand.vmem [shape: f32[8,128], index: 2, kind: input, shape index: {}]
  %s3 = inlined_call_operand.vmem [shape: f32[128,128], index: 3, kind: input, shape index: {}]
  %s4 = inlined_call_operand.vmem [shape: f32[128,128], index: 4, kind: input, shape index: {}]
  %s5 = inlined_call_operand.vmem [shape: f32[128,128], index: 5, kind: input, shape index: {}]
  %s6 = inlined_call_operand.vmem [shape: f32[8,8,128], index: 6, kind: output, shape index: {0}]
  %s7 = inlined_call_operand.hbm [shape: f32[8,8,128], index: 7, kind: output, shape index: {1}]
  %8 = xla_tuple %s6, %s7
  %s9 = sld [smem:[#allocation0]]
  $region69: #{knn_rollout.1} parent=0
    _
  %s11 = ssub.s32 1, %s9
  %s12 = scalar_select 0, %s11, %s9
  $region1: #{knn_rollout.1} parent=0
    #allocation3 [shape = 'u8[8192]{0}', space=vmem, size = 0x2000, scoped, tag = 'output window, operand 1']
    #allocation4 [shape = 's32[2]{0}', space=sflag, size = 0x8, scoped, tag = 'scoped memory for knn_rollout.1']
    %13 = vsyncpa [#allocation4], 0
    %s14 = scalar_lea.sflag [#allocation4], 1
    %15 = vsyncpa %s14, 0
    loop: start=0, step=1, limit=10
    $region2: #{knn_rollout.1} parent=1 // loop_pre_header
      _
    $region3: #{knn_rollout.1} parent=1 // loop_header
      %s17 = sphi 0, %s21
      %p18 = scmp.ge.s32.totalorder %s17, 10
      %s27 = sphi 0, %s29
      %s30 = sphi 0, %s27
      %s31 = sphi 0, %s30
      %s47 = sphi 0, %s31
      %s51 = sphi 0, %s51
      %s53 = sphi 0, %s51
      %s54 = sphi 0, %s53
      %s68 = sphi 0, %s54
      %s72 = sphi 0, %s72
      %s74 = sphi 0, %s72
      %s75 = sphi 0, %s74
      %s89 = sphi 0, %s75
      %s93 = sphi 0, %s93
      %s95 = sphi 0, %s93
      %s96 = sphi 0, %s95
      %s110 = sphi 0, %s96
      %s114 = sphi 0, %s114
      %s116 = sphi 0, %s114
      %s117 = sphi 0, %s116
      %s131 = sphi 0, %s117
      %s135 = sphi 0, %s135
      %s137 = sphi 0, %s135
      %s138 = sphi 0, %s137
      %s152 = sphi 0, %s138
      %s158 = sphi 0, %s160
      %s161 = sphi 0, %s158
      %s162 = sphi 0, %s161
      %s178 = sphi 0, %s162
      %s184 = sphi 0, %s186
      %s187 = sphi 0, %s184
      %s188 = sphi 0, %s187
      %s204 = sphi 0, %s188
    $region4: #{knn_rollout.1} parent=1 // loop_header_branch
      %20 = sbr.rel (%p18) target = $region8
    $region5: #{knn_rollout.1} parent=1 // loop_body
      %s22 = ssub.s32 %s17, 1
      %s23 = ssub.s32 %s17, 2
      %s24 = sadd.s32 %s17, 1
      %s25 = ssub.s32 %s17, %s24
      %p26 = scmp.eq.s32.totalorder %s25, 0
      %s28 = sadd.s32 %s27, 1
      %s29 = scalar_select %p26, %s27, %s28
      %p32 = pneg %p26
      %p33 = scmp.eq.s32.totalorder %s17, 7
      %p34 = por %p32, %p33
      %p35 = scmp.ne.s32.totalorder %s27, %s30
      %p36 = scmp.eq.s32.totalorder %s17, 0
      %p37 = por %p35, %p36
      %p38 = scmp.ne.s32.totalorder %s27, %s30
      %p39 = scmp.eq.s32.totalorder %s22, 7
      %p40 = por %p38, %p39
      %p41 = scmp.ne.s32.totalorder %s30, %s31
      %p42 = scmp.eq.s32.totalorder %s22, 0
      %p43 = por %p41, %p42
      %p44 = scmp.ne.s32.totalorder %s30, %s31
      %p45 = scmp.eq.s32.totalorder %s23, 7
      %p46 = por %p44, %p45
      %p48 = scmp.ne.s32.totalorder %s31, %s47
      %p49 = scmp.eq.s32.totalorder %s23, 0
      %p50 = por %p48, %p49
      %s52 = sadd.s32 %s51, 1
      %p55 = scmp.eq.s32.totalorder %s17, 7
      %p56 = scmp.ne.s32.totalorder %s51, %s53
      %p57 = scmp.eq.s32.totalorder %s17, 0
      %p58 = por %p56, %p57
      %p59 = scmp.ne.s32.totalorder %s51, %s53
      %p60 = scmp.eq.s32.totalorder %s22, 7
      %p61 = por %p59, %p60
      %p62 = scmp.ne.s32.totalorder %s53, %s54
      %p63 = scmp.eq.s32.totalorder %s22, 0
      %p64 = por %p62, %p63
      %p65 = scmp.ne.s32.totalorder %s53, %s54
      %p66 = scmp.eq.s32.totalorder %s23, 7
      %p67 = por %p65, %p66
      %p69 = scmp.ne.s32.totalorder %s54, %s68
      %p70 = scmp.eq.s32.totalorder %s23, 0
      %p71 = por %p69, %p70
      %s73 = sadd.s32 %s72, 1
      %p76 = scmp.eq.s32.totalorder %s17, 7
      %p77 = scmp.ne.s32.totalorder %s72, %s74
      %p78 = scmp.eq.s32.totalorder %s17, 0
      %p79 = por %p77, %p78
      %p80 = scmp.ne.s32.totalorder %s72, %s74
      %p81 = scmp.eq.s32.totalorder %s22, 7
      %p82 = por %p80, %p81
      %p83 = scmp.ne.s32.totalorder %s74, %s75
      %p84 = scmp.eq.s32.totalorder %s22, 0
      %p85 = por %p83, %p84
      %p86 = scmp.ne.s32.totalorder %s74, %s75
      %p87 = scmp.eq.s32.totalorder %s23, 7
      %p88 = por %p86, %p87
      %p90 = scmp.ne.s32.totalorder %s75, %s89
      %p91 = scmp.eq.s32.totalorder %s23, 0
      %p92 = por %p90, %p91
      %s94 = sadd.s32 %s93, 1
      %p97 = scmp.eq.s32.totalorder %s17, 7
      %p98 = scmp.ne.s32.totalorder %s93, %s95
      %p99 = scmp.eq.s32.totalorder %s17, 0
      %p100 = por %p98, %p99
      %p101 = scmp.ne.s32.totalorder %s93, %s95
      %p102 = scmp.eq.s32.totalorder %s22, 7
      %p103 = por %p101, %p102
      %p104 = scmp.ne.s32.totalorder %s95, %s96
      %p105 = scmp.eq.s32.totalorder %s22, 0
      %p106 = por %p104, %p105
      %p107 = scmp.ne.s32.totalorder %s95, %s96
      %p108 = scmp.eq.s32.totalorder %s23, 7
      %p109 = por %p107, %p108
      %p111 = scmp.ne.s32.totalorder %s96, %s110
      %p112 = scmp.eq.s32.totalorder %s23, 0
      %p113 = por %p111, %p112
      %s115 = sadd.s32 %s114, 1
      %p118 = scmp.eq.s32.totalorder %s17, 7
      %p119 = scmp.ne.s32.totalorder %s114, %s116
      %p120 = scmp.eq.s32.totalorder %s17, 0
      %p121 = por %p119, %p120
      %p122 = scmp.ne.s32.totalorder %s114, %s116
      %p123 = scmp.eq.s32.totalorder %s22, 7
      %p124 = por %p122, %p123
      %p125 = scmp.ne.s32.totalorder %s116, %s117
      %p126 = scmp.eq.s32.totalorder %s22, 0
      %p127 = por %p125, %p126
      %p128 = scmp.ne.s32.totalorder %s116, %s117
      %p129 = scmp.eq.s32.totalorder %s23, 7
      %p130 = por %p128, %p129
      %p132 = scmp.ne.s32.totalorder %s117, %s131
      %p133 = scmp.eq.s32.totalorder %s23, 0
      %p134 = por %p132, %p133
      %s136 = sadd.s32 %s135, 1
      %p139 = scmp.eq.s32.totalorder %s17, 7
      %p140 = scmp.ne.s32.totalorder %s135, %s137
      %p141 = scmp.eq.s32.totalorder %s17, 0
      %p142 = por %p140, %p141
      %p143 = scmp.ne.s32.totalorder %s135, %s137
      %p144 = scmp.eq.s32.totalorder %s22, 7
      %p145 = por %p143, %p144
      %p146 = scmp.ne.s32.totalorder %s137, %s138
      %p147 = scmp.eq.s32.totalorder %s22, 0
      %p148 = por %p146, %p147
      %p149 = scmp.ne.s32.totalorder %s137, %s138
      %p150 = scmp.eq.s32.totalorder %s23, 7
      %p151 = por %p149, %p150
      %p153 = scmp.ne.s32.totalorder %s138, %s152
      %p154 = scmp.eq.s32.totalorder %s23, 0
      %p155 = por %p153, %p154
      %s156 = ssub.s32 %s17, %s24
      %p157 = scmp.eq.s32.totalorder %s156, 0
      %s159 = sadd.s32 %s158, 1
      %s160 = scalar_select %p157, %s158, %s159
      %p163 = pneg %p157
      %p164 = scmp.eq.s32.totalorder %s17, 7
      %p165 = por %p163, %p164
      %p166 = scmp.ne.s32.totalorder %s158, %s161
      %p167 = scmp.eq.s32.totalorder %s17, 0
      %p168 = por %p166, %p167
      %p169 = scmp.ne.s32.totalorder %s158, %s161
      %p170 = scmp.eq.s32.totalorder %s22, 7
      %p171 = por %p169, %p170
      %p172 = scmp.ne.s32.totalorder %s161, %s162
      %p173 = scmp.eq.s32.totalorder %s22, 0
      %p174 = por %p172, %p173
      %p175 = scmp.ne.s32.totalorder %s161, %s162
      %p176 = scmp.eq.s32.totalorder %s23, 7
      %p177 = por %p175, %p176
      %p179 = scmp.ne.s32.totalorder %s162, %s178
      %p180 = scmp.eq.s32.totalorder %s23, 0
      %p181 = por %p179, %p180
      %s182 = ssub.s32 %s17, %s24
      %p183 = scmp.eq.s32.totalorder %s182, 0
      %s185 = sadd.s32 %s184, 1
      %s186 = scalar_select %p183, %s184, %s185
      %p189 = pneg %p183
      %p190 = scmp.eq.s32.totalorder %s17, 7
      %p191 = por %p189, %p190
      %p192 = scmp.ne.s32.totalorder %s184, %s187
      %p193 = scmp.eq.s32.totalorder %s17, 0
      %p194 = por %p192, %p193
      %p195 = scmp.ne.s32.totalorder %s184, %s187
      %p196 = scmp.eq.s32.totalorder %s22, 7
      %p197 = por %p195, %p196
      %p198 = scmp.ne.s32.totalorder %s187, %s188
      %p199 = scmp.eq.s32.totalorder %s22, 0
      %p200 = por %p198, %p199
      %p201 = scmp.ne.s32.totalorder %s187, %s188
      %p202 = scmp.eq.s32.totalorder %s23, 7
      %p203 = por %p201, %p202
      %p205 = scmp.ne.s32.totalorder %s188, %s204
      %p206 = scmp.eq.s32.totalorder %s23, 0
      %p207 = por %p205, %p206
      %p208 = scmp.le.s32.totalorder 1, %s17
      %p209 = scmp.lt.s32.totalorder %s17, 9
      %p210 = pnand %p208, %p209
      %p211 = pneg %p210
      // Predicated region
      $region9: #{knn_rollout.1} parent=5 // pred_check
        _
      $region10: #{knn_rollout.1} parent=5 // pred_check_branch
        %213 = sbr.rel (%p210) target = $region12
      $region11: #{knn_rollout.1} parent=5 // pred_region
        %s214 = ssub.s32 %s17, 1
        // Predicated region
        $region13: #{knn_rollout.1} parent=11 // pred_check
          %p215 = pneg %p64
        $region14: #{knn_rollout.1} parent=11 // pred_check_branch
          %217 = sbr.rel (%p215) target = $region16
        $region15: #{knn_rollout.1} parent=11 // pred_region
          _
        $region16: #{knn_rollout.1} parent=11 // pred_fallthru
          _
        // Predicated region
        $region17: #{knn_rollout.1} parent=11 // pred_check
          %p218 = pneg %p85
        $region18: #{knn_rollout.1} parent=11 // pred_check_branch
          %220 = sbr.rel (%p218) target = $region20
        $region19: #{knn_rollout.1} parent=11 // pred_region
          _
        $region20: #{knn_rollout.1} parent=11 // pred_fallthru
          _
        // Predicated region
        $region21: #{knn_rollout.1} parent=11 // pred_check
          %p221 = pneg %p106
        $region22: #{knn_rollout.1} parent=11 // pred_check_branch
          %223 = sbr.rel (%p221) target = $region24
        $region23: #{knn_rollout.1} parent=11 // pred_region
          _
        $region24: #{knn_rollout.1} parent=11 // pred_fallthru
          _
        // Predicated region
        $region25: #{knn_rollout.1} parent=11 // pred_check
          %p224 = pneg %p127
        $region26: #{knn_rollout.1} parent=11 // pred_check_branch
          %226 = sbr.rel (%p224) target = $region28
        $region27: #{knn_rollout.1} parent=11 // pred_region
          _
        $region28: #{knn_rollout.1} parent=11 // pred_fallthru
          _
        // Predicated region
        $region29: #{knn_rollout.1} parent=11 // pred_check
          %p227 = pneg %p148
        $region30: #{knn_rollout.1} parent=11 // pred_check_branch
          %229 = sbr.rel (%p227) target = $region32
        $region31: #{knn_rollout.1} parent=11 // pred_region
          _
        $region32: #{knn_rollout.1} parent=11 // pred_fallthru
          _
      $region12: #{knn_rollout.1} parent=5 // pred_fallthru
        _
      %p230 = scmp.lt.s32.totalorder %s17, 8
      // Predicated region
      $region33: #{knn_rollout.1} parent=5 // pred_check
        %p231 = pneg %p230
      $region34: #{knn_rollout.1} parent=5 // pred_check_branch
        %233 = sbr.rel (%p231) target = $region36
      $region35: #{knn_rollout.1} parent=5 // pred_region
        // Predicated region
        $region37: #{knn_rollout.1} parent=35 // pred_check
          %p234 = pneg %p37
        $region38: #{knn_rollout.1} parent=35 // pred_check_branch
          %236 = sbr.rel (%p234) target = $region40
        $region39: #{knn_rollout.1} parent=35 // pred_region
          %p237 = scmp.lt.s32.totalorder %s17, 7
          %s238 = scalar_select %p237, %s17, 7
          %s239 = smul.addr %s238, 8
          %s240 = scalar_lea.vmem %s0, %s239
        $region40: #{knn_rollout.1} parent=35 // pred_fallthru
          _
      $region36: #{knn_rollout.1} parent=5 // pred_fallthru
        _
      %p241 = scmp.le.s32.totalorder 1, %s17
      %p242 = scmp.lt.s32.totalorder %s17, 9
      %p243 = pnand %p241, %p242
      %p244 = pneg %p243
      // Predicated region
      $region41: #{knn_rollout.1} parent=5 // pred_check
        _
      $region42: #{knn_rollout.1} parent=5 // pred_check_branch
        %246 = sbr.rel (%p243) target = $region44
      $region43: #{knn_rollout.1} parent=5 // pred_region
        %s247 = ssub.s32 %s17, 1
        %p248 = scmp.lt.s32.totalorder %s22, 7
        %s249 = scalar_select %p248, %s22, 7
        %s250 = smul.addr %s249, 8
        %s251 = scalar_lea.vmem %s0, %s250
        %p252 = pneg %p43
        %p253 = pneg %p40
        %p254 = pneg %p64
        %p255 = pneg %p61
        %p256 = pneg %p85
        %p257 = pneg %p82
        %p258 = pneg %p106
        %p259 = pneg %p103
        %p260 = pneg %p127
        %p261 = pneg %p124
        %p262 = pneg %p148
        %p263 = pneg %p145
        %p264 = pneg %p174
        %p265 = pneg %p171
        %p266 = scmp.lt.s32.totalorder %s22, 7
        %s267 = scalar_select %p266, %s22, 7
        %s268 = smul.addr %s267, 8
        %s269 = scalar_lea.vmem %s6, %s268
        %p270 = pneg %p200
        %p271 = pneg %p197
        %s272 = sand.u32 %s187, 1
        %s273 = scalar_lea.sflag [#allocation4], %s272
        %s274 = sand.u32 %s187, 1
        %s275 = smul.addr %s274, 8
        %s276 = scalar_lea.vmem [#allocation3], %s275
        %p277 = scmp.lt.s32.totalorder %s22, 7
        %s278 = scalar_select %p277, %s22, 7
        %s279 = smul.addr %s278, 8
        %s280 = scalar_lea.vmem %s0, %s279
        %p281 = scmp.lt.s32.totalorder %s22, 7
        %s282 = scalar_select %p281, %s22, 7
        %s283 = smul.addr %s282, 8
        %s284 = scalar_lea.vmem %s6, %s283
        %p285 = scmp.eq.s32.totalorder %s22, 0
        // Predicated region
        $region45: #{knn_rollout.1} parent=43 // pred_check
          %p286 = pneg %p285
        $region46: #{knn_rollout.1} parent=43 // pred_check_branch
          %288 = sbr.rel (%p286) target = $region48
        $region47: #{knn_rollout.1} parent=43 // pred_region
          %v289 = vld [vmem:[%s1] sm:$0xff]
          %290 = vst [vmem:[#allocation2] sm:$0xff] %v289
        $region48: #{knn_rollout.1} parent=43 // pred_fallthru
          _
        %v291 = vld [vmem:[%s280] sm:$0xff]
        %v292 = vld [vmem:[#allocation2] sm:$0xff]
        %v293 = vld [vmem:[%s2] sm:$0xff]
        %v294 = vld [vmem:[%s3] sm:$0xff]
        %v295 = vld [vmem:[%s3 + $0x8] sm:$0xff]
        %v296 = vld [vmem:[%s3 + $0x10] sm:$0xff]
        %v297 = vld [vmem:[%s3 + $0x18] sm:$0xff]
        %v298 = vld [vmem:[%s3 + $0x20] sm:$0xff]
        %v299 = vld [vmem:[%s3 + $0x28] sm:$0xff]
        %v300 = vld [vmem:[%s3 + $0x30] sm:$0xff]
        %v301 = vld [vmem:[%s3 + $0x38] sm:$0xff]
        %v302 = vld [vmem:[%s3 + $0x40] sm:$0xff]
        %v303 = vld [vmem:[%s3 + $0x48] sm:$0xff]
        %v304 = vld [vmem:[%s3 + $0x50] sm:$0xff]
        %v305 = vld [vmem:[%s3 + $0x58] sm:$0xff]
        %v306 = vld [vmem:[%s3 + $0x60] sm:$0xff]
        %v307 = vld [vmem:[%s3 + $0x68] sm:$0xff]
        %v308 = vld [vmem:[%s3 + $0x70] sm:$0xff]
        %v309 = vld [vmem:[%s3 + $0x78] sm:$0xff]
        %310 = vmatpush.msra.mxu0 %v309
        %311 = vmatpush.msra.mxu0 %v308
        %312 = vmatpush.msra.mxu0 %v307
        %313 = vmatpush.msra.mxu0 %v306
        %314 = vmatpush.msra.mxu0 %v305
        %315 = vmatpush.msra.mxu0 %v304
        %316 = vmatpush.msra.mxu0 %v303
        %317 = vmatpush.msra.mxu0 %v302
        %318 = vmatpush.msra.mxu0 %v301
        %319 = vmatpush.msra.mxu0 %v300
        %320 = vmatpush.msra.mxu0 %v299
        %321 = vmatpush.msra.mxu0 %v298
        %322 = vmatpush.msra.mxu0 %v297
        %323 = vmatpush.msra.mxu0 %v296
        %324 = vmatpush.msra.mxu0 %v295
        %325 = vmatpush.msra.mxu0 %v294
        %326 = vmatmul.f32.gmra.mxu0 %v292
        %v327 = vpop.f32.mrf.mxu0
        %v328 = vadd.f32 0.0, %v327
        %329 = vdwg.mxu0
        %vm330 = vcmask 64512
        %v332 = vsel %vm330, %v291, 0
        %334 = vmatpush.msra.mxu0 0.0
        %335 = vmatpush.msra.mxu0 0.0
        %336 = vmatpush.msra.mxu0 0.0
        %337 = vmatpush.msra.mxu0 0.0
        %338 = vmatpush.msra.mxu0 0.0
        %339 = vmatpush.msra.mxu0 0.0
        %340 = vmatpush.msra.mxu0 0.0
        %341 = vmatpush.msra.mxu0 0.0
        %342 = vmatpush.msra.mxu0 0.0
        %343 = vmatpush.msra.mxu0 0.0
        %344 = vmatpush.msra.mxu0 0.0
        %345 = vmatpush.msra.mxu0 0.0
        %346 = vmatpush.msra.mxu0 0.0
        %347 = vmatpush.msra.mxu0 0.0
        %348 = vmatpush.msra.mxu0 0.0
        %349 = vmatpush.msra.mxu0 %v293
        %350 = vmatmul.f32.gmra.mxu0 %v332
        %v351 = vpop.f32.mrf.mxu0
        %v352 = vadd.f32 %v328, %v351
        %353 = vdwg.mxu0
        %vm354 = vcmp.gt.f32.partialorder %v352, 0.0
        %v355 = vmul.f32 %v352, 0.01
        %v356 = vsel %vm354, %v352, %v355
        %v357 = vld [vmem:[%s4] sm:$0xff]
        %v358 = vld [vmem:[%s4 + $0x8] sm:$0xff]
        %v359 = vld [vmem:[%s4 + $0x10] sm:$0xff]
        %v360 = vld [vmem:[%s4 + $0x18] sm:$0xff]
        %v361 = vld [vmem:[%s4 + $0x20] sm:$0xff]
        %v362 = vld [vmem:[%s4 + $0x28] sm:$0xff]
        %v363 = vld [vmem:[%s4 + $0x30] sm:$0xff]
        %v364 = vld [vmem:[%s4 + $0x38] sm:$0xff]
        %v365 = vld [vmem:[%s4 + $0x40] sm:$0xff]
        %v366 = vld [vmem:[%s4 + $0x48] sm:$0xff]
        %v367 = vld [vmem:[%s4 + $0x50] sm:$0xff]
        %v368 = vld [vmem:[%s4 + $0x58] sm:$0xff]
        %v369 = vld [vmem:[%s4 + $0x60] sm:$0xff]
        %v370 = vld [vmem:[%s4 + $0x68] sm:$0xff]
        %v371 = vld [vmem:[%s4 + $0x70] sm:$0xff]
        %v372 = vld [vmem:[%s4 + $0x78] sm:$0xff]
        %373 = vmatpush.msra.mxu0 %v372
        %374 = vmatpush.msra.mxu0 %v371
        %375 = vmatpush.msra.mxu0 %v370
        %376 = vmatpush.msra.mxu0 %v369
        %377 = vmatpush.msra.mxu0 %v368
        %378 = vmatpush.msra.mxu0 %v367
        %379 = vmatpush.msra.mxu0 %v366
        %380 = vmatpush.msra.mxu0 %v365
        %381 = vmatpush.msra.mxu0 %v364
        %382 = vmatpush.msra.mxu0 %v363
        %383 = vmatpush.msra.mxu0 %v362
        %384 = vmatpush.msra.mxu0 %v361
        %385 = vmatpush.msra.mxu0 %v360
        %386 = vmatpush.msra.mxu0 %v359
        %387 = vmatpush.msra.mxu0 %v358
        %388 = vmatpush.msra.mxu0 %v357
        %389 = vmatmul.f32.gmra.mxu0 %v356
        %v390 = vpop.f32.mrf.mxu0
        %v391 = vadd.f32 0.0, %v390
        %392 = vdwg.mxu0
        %vm393 = vcmp.gt.f32.partialorder %v391, 0.0
        %v394 = vmul.f32 %v391, 0.01
        %v395 = vsel %vm393, %v391, %v394
        %396 = vst [vmem:[#allocation2] sm:$0xff] %v395
        %397 = vst [vmem:[%s276] sm:$0xff] %v395
        %v398 = vld [vmem:[%s5] sm:$0xff]
        %v399 = vld [vmem:[%s5 + $0x8] sm:$0xff]
        %v400 = vld [vmem:[%s5 + $0x10] sm:$0xff]
        %v401 = vld [vmem:[%s5 + $0x18] sm:$0xff]
        %v402 = vld [vmem:[%s5 + $0x20] sm:$0xff]
        %v403 = vld [vmem:[%s5 + $0x28] sm:$0xff]
        %v404 = vld [vmem:[%s5 + $0x30] sm:$0xff]
        %v405 = vld [vmem:[%s5 + $0x38] sm:$0xff]
        %v406 = vld [vmem:[%s5 + $0x40] sm:$0xff]
        %v407 = vld [vmem:[%s5 + $0x48] sm:$0xff]
        %v408 = vld [vmem:[%s5 + $0x50] sm:$0xff]
        %v409 = vld [vmem:[%s5 + $0x58] sm:$0xff]
        %v410 = vld [vmem:[%s5 + $0x60] sm:$0xff]
        %v411 = vld [vmem:[%s5 + $0x68] sm:$0xff]
        %v412 = vld [vmem:[%s5 + $0x70] sm:$0xff]
        %v413 = vld [vmem:[%s5 + $0x78] sm:$0xff]
        %414 = vmatpush.msra.mxu0 %v413
        %415 = vmatpush.msra.mxu0 %v412
        %416 = vmatpush.msra.mxu0 %v411
        %417 = vmatpush.msra.mxu0 %v410
        %418 = vmatpush.msra.mxu0 %v409
        %419 = vmatpush.msra.mxu0 %v408
        %420 = vmatpush.msra.mxu0 %v407
        %421 = vmatpush.msra.mxu0 %v406
        %422 = vmatpush.msra.mxu0 %v405
        %423 = vmatpush.msra.mxu0 %v404
        %424 = vmatpush.msra.mxu0 %v403
        %425 = vmatpush.msra.mxu0 %v402
        %426 = vmatpush.msra.mxu0 %v401
        %427 = vmatpush.msra.mxu0 %v400
        %428 = vmatpush.msra.mxu0 %v399
        %429 = vmatpush.msra.mxu0 %v398
        %430 = vmatmul.f32.gmra.mxu0 %v395
        %v431 = vpop.f32.mrf.mxu0
        %v432 = vadd.f32 0.0, %v431
        %433 = vdwg.mxu0
        %434 = vst [vmem:[%s284] sm:$0xff] %v432
        %p435 = scmp.lt.s32.totalorder %s22, 7
        %s436 = scalar_select %p435, %s22, 7
        %s437 = smul.addr %s436, 8
        %s438 = scalar_lea.vmem %s6, %s437
        %s439 = sand.u32 %s187, 1
        %s440 = scalar_lea.sflag [#allocation4], %s439
        %s441 = sand.u32 %s187, 1
        %s442 = smul.addr %s441, 8
        %s443 = scalar_lea.vmem [#allocation3], %s442
        // Predicated region
        $region49: #{knn_rollout.1} parent=43 // pred_check
          %p444 = pneg %p171
        $region50: #{knn_rollout.1} parent=43 // pred_check_branch
          %446 = sbr.rel (%p444) target = $region52
        $region51: #{knn_rollout.1} parent=43 // pred_region
          _
        $region52: #{knn_rollout.1} parent=43 // pred_fallthru
          _
        // Predicated region
        $region53: #{knn_rollout.1} parent=43 // pred_check
          %p447 = pneg %p197
        $region54: #{knn_rollout.1} parent=43 // pred_check_branch
          %449 = sbr.rel (%p447) target = $region56
        $region55: #{knn_rollout.1} parent=43 // pred_region
          %451 = vsyncadd %s440, 0
          %s452 = smul.addr %s22, 8
          %s453 = scalar_lea.hbm %s7, %s452
          %s455 = sshll.u32 %s443, 4
          %s456 = int_to_ptr.vmem [resolvable:$true] %s455
          %s457 = sshll.u32 %s453, 4
          %s458 = int_to_ptr.hbm [resolvable:$true] %s457
          %460 = dma.vmem_to_hbm [thread:$0]  %s456, 128, %s458, %s440
        $region56: #{knn_rollout.1} parent=43 // pred_fallthru
          _
      $region44: #{knn_rollout.1} parent=5 // pred_fallthru
        _
      %p461 = scmp.le.s32.totalorder 2, %s17
      // Predicated region
      $region57: #{knn_rollout.1} parent=5 // pred_check
        %p462 = pneg %p461
      $region58: #{knn_rollout.1} parent=5 // pred_check_branch
        %464 = sbr.rel (%p462) target = $region60
      $region59: #{knn_rollout.1} parent=5 // pred_region
        %s465 = ssub.s32 %s17, 2
        // Predicated region
        $region61: #{knn_rollout.1} parent=59 // pred_check
          %p466 = pneg %p177
        $region62: #{knn_rollout.1} parent=59 // pred_check_branch
          %468 = sbr.rel (%p466) target = $region64
        $region63: #{knn_rollout.1} parent=59 // pred_region
          %p469 = scmp.lt.s32.totalorder %s23, 7
          %s470 = scalar_select %p469, %s23, 7
          %s471 = smul.addr %s470, 8
          %s472 = scalar_lea.vmem %s6, %s471
        $region64: #{knn_rollout.1} parent=59 // pred_fallthru
          _
        // Predicated region
        $region65: #{knn_rollout.1} parent=59 // pred_check
          %p473 = pneg %p203
        $region66: #{knn_rollout.1} parent=59 // pred_check_branch
          %475 = sbr.rel (%p473) target = $region68
        $region67: #{knn_rollout.1} parent=59 // pred_region
          %s476 = sand.u32 %s188, 1
          %s477 = scalar_lea.sflag [#allocation4], %s476
          %s478 = sand.u32 %s188, 1
          %s479 = smul.addr %s478, 8
          %s480 = scalar_lea.vmem [#allocation3], %s479
          %482 = dma.done %s477, 128
        $region68: #{knn_rollout.1} parent=59 // pred_fallthru
          _
      $region60: #{knn_rollout.1} parent=5 // pred_fallthru
        _
    $region6: #{knn_rollout.1} parent=1 // loop_footer
      %s21 = sadd.s32 1, %s17
    $region7: #{knn_rollout.1} parent=1 // loop_footer_branch
      %16 = sbr.rel target = $region3
    $region8: #{knn_rollout.1} parent=1 // loop_exit
      _
    %483 = vsyncpa [#allocation4], 1
    %s484 = scalar_lea.sflag [#allocation4], 1
    %485 = vsyncpa %s484, 1

</llo_original>
